<compile_context>
chip_gen: v6e
topology: v6e:2x2x1
jax: 0.10.0
libtpu: 0.0.40
codegen_flags: <defaults>
</compile_context>

<pallas_src>
import jax
import jax.numpy as jnp
from jax.experimental import pallas as pl
from jax.experimental.pallas import tpu as pltpu

LANE = 256          # lane-dense tile granularity (multiple of 128)
PIX_BUDGET = 8192   # pixels per grid step; ~0.8 KB/pixel VMEM -> safe on all gens


def _round_up(x, m):
    return (x + m - 1) // m * m


def _largest_divisor_leq(n, cap):
    cap = max(1, min(n, cap))
    for d in range(cap, 0, -1):
        if n % d == 0:
            return d
    return 1


def _fused_kernel(x_ref, w1_ref, b1_ref, w2_ref, b2_ref, w3_ref, b3_ref, o_ref):
    # x_ref: (g, 1, tile_p) f32 ; o_ref: (g, 64, tile_p) f32.
    # Weights are channel-transposed (Cout on sublanes):
    #   w1: (32, 1), w2: (64, 32), w3: (64, 64), biases (C, 1) -- all f32.
    w1 = w1_ref[...]
    b1 = b1_ref[...]
    w2 = w2_ref[...]
    b2 = b2_ref[...]
    w3 = w3_ref[...]
    b3 = b3_ref[...]

    g = x_ref.shape[0]
    for i in range(g):  # static unroll over the whole batches covered by this tile
        x = x_ref[i]                                                  # (1, tile_p)

        # Layer 1 (Cin=1): VPU outer product + EUP tanh (f32 everywhere).
        h1 = jnp.tanh(w1 * x + b1)                                    # (32, tile_p)

        # Layer 2: MXU matmul (f32 operands, f32 accumulate) + bias + tanh.
        h2 = jnp.tanh(
            jnp.dot(w2, h1, preferred_element_type=jnp.float32) + b2)  # (64, tile_p)

        # Layer 3: MXU matmul + bias.
        o = jnp.dot(w3, h2, preferred_element_type=jnp.float32) + b3   # (64, tile_p)

        o_ref[i] = o.astype(o_ref.dtype)


def model_tanh_forward(x_nchw, params):
    """x_nchw: (B, 1, H, W) float32 -> (B, 64, ceil(H/4), ceil(W/4)) float32."""
    w1, b1, w2, b2, w3, b3 = params                 # w*: (Cin, Cout), b*: (1, Cout)
    B, Cin, H, W = x_nchw.shape
    assert Cin == 1, "ModelTanh has a single input channel"

    # Two 1x1 stride-2 VALID convs then a 1x1 stride-1 conv: output pixel (i, j)
    # depends only on input pixel (4i, 4j) -> keep every 4th pixel.
    xs = x_nchw[:, :, ::4, ::4]                                       # (B, 1, Ho, Wo)
    Ho, Wo = xs.shape[2], xs.shape[3]
    P = Ho * Wo

    # ---- Tile selection --------------------------------------------------
    Pp = _round_up(P, LANE)
    if Pp <= PIX_BUDGET:
        # Small per-batch pixel count: fold whole batches into each tile.
        tile_p = Pp
        g = _largest_divisor_leq(B, min(PIX_BUDGET // Pp, max(1, B // 2)))
        # Keep >= 2 grid steps (v7x has 2 TensorCores) when it is cheap to split.
        if B // g == 1 and Pp % (2 * LANE) == 0:
            tile_p = Pp // 2
    else:
        # Large images: one batch per tile, up to 8192 lane-dense pixels per step.
        g = 1
        tile_p = PIX_BUDGET
        Pp = _round_up(P, tile_p)

    xflat = xs.reshape(B, 1, P)
    if Pp != P:
        xflat = jnp.pad(xflat, ((0, 0), (0, 0), (0, Pp - P)))

    c1, c2, c3 = w1.shape[1], w2.shape[1], w3.shape[1]                # 32, 64, 64

    # Channel-transposed weights / biases (outputs on sublanes), all f32.
    w1t = jnp.transpose(w1)                                           # (32, 1)
    b1t = jnp.reshape(b1, (c1, 1))                                    # (32, 1)
    w2t = jnp.transpose(w2)                                           # (64, 32)
    b2t = jnp.reshape(b2, (c2, 1))                                    # (64, 1)
    w3t = jnp.transpose(w3)                                           # (64, 64)
    b3t = jnp.reshape(b3, (c3, 1))                                    # (64, 1)

    grid = (B // g, Pp // tile_p)

    out = pl.pallas_call(
        _fused_kernel,
        out_shape=jax.ShapeDtypeStruct((B, c3, Pp), x_nchw.dtype),
        grid=grid,
        in_specs=[
            pl.BlockSpec((g, 1, tile_p), lambda bi, pi: (bi, 0, pi)),  # pixels
            pl.BlockSpec((c1, 1), lambda bi, pi: (0, 0)),              # w1^T
            pl.BlockSpec((c1, 1), lambda bi, pi: (0, 0)),              # b1
            pl.BlockSpec((c2, c1), lambda bi, pi: (0, 0)),             # w2^T
            pl.BlockSpec((c2, 1), lambda bi, pi: (0, 0)),              # b2
            pl.BlockSpec((c3, c2), lambda bi, pi: (0, 0)),             # w3^T
            pl.BlockSpec((c3, 1), lambda bi, pi: (0, 0)),              # b3
        ],
        out_specs=pl.BlockSpec((g, c3, tile_p), lambda bi, pi: (bi, 0, pi)),
        compiler_params=pltpu.CompilerParams(
            dimension_semantics=("parallel", "parallel")),
    )(xflat, w1t, b1t, w2t, b2t, w3t, b3t)

    # Already NCHW channel-major: trim padding, fold pixels back to (Ho, Wo).
    return out[:, :, :P].reshape(B, c3, Ho, Wo)


def init_params(key):
    """Deterministic PyTorch-style (kaiming-uniform-ish) init for the 1x1 convs."""
    def conv_init(k, cin, cout):
        kw, kb = jax.random.split(k)
        bound = 1.0 / jnp.sqrt(jnp.float32(cin))
        w = jax.random.uniform(kw, (cin, cout), jnp.float32, -bound, bound)
        b = jax.random.uniform(kb, (1, cout), jnp.float32, -bound, bound)
        return w, b
    k1, k2, k3 = jax.random.split(key, 3)
    w1, b1 = conv_init(k1, 1, 32)
    w2, b2 = conv_init(k2, 32, 64)
    w3, b3 = conv_init(k3, 64, 64)
    return w1, b1, w2, b2, w3, b3


def reference(x_nchw, params):
    """Pure-JAX reference following the PyTorch graph exactly (real strided convs)."""
    w1, b1, w2, b2, w3, b3 = params

    def conv1x1(x, w, b, stride):
        wk = jnp.transpose(w, (1, 0))[:, :, None, None]               # OIHW
        y = jax.lax.conv_general_dilated(
            x, wk, window_strides=(stride, stride), padding="VALID",
            dimension_numbers=("NCHW", "OIHW", "NCHW"),
            precision=jax.lax.Precision.HIGHEST)
        return y + b.reshape(1, -1, 1, 1)

    v1 = conv1x1(x_nchw, w1, b1, 2)
    v2 = jnp.tanh(v1)
    v3 = conv1x1(v2, w2, b2, 2)
    v4 = jnp.tanh(v3)
    return conv1x1(v4, w3, b3, 1)


if __name__ == "__main__":
    key = jax.random.PRNGKey(0)
    kx, kp = jax.random.split(key)

    # Small input consistent with the module: NCHW, 1 input channel.
    x = jax.random.normal(kx, (2, 1, 64, 64), dtype=jnp.float32)
    params = init_params(kp)

    fwd = jax.jit(model_tanh_forward)
    out = jax.block_until_ready(fwd(x, params))

    ref = jax.block_until_ready(reference(x, params))
    assert out.shape == ref.shape == (2, 64, 16, 16), out.shape
    # Kernel matmuls are now full f32 (f32 accumulate), so the tolerance is much
    # tighter than the previous bf16-operand version.
    max_err = float(jnp.max(jnp.abs(out - ref)))
    assert jnp.allclose(out, ref, rtol=1e-2, atol=1e-2), max_err

    print("KERNEL_OK")
</pallas_src>

<mosaic_0001>
module attributes {stable_mosaic.version = 11 : i64} {
  func.func @_fused_kernel(%arg0: i32, %arg1: i32, %arg2: memref<1x1x256xf32, #tpu.memory_space<vmem>>, %arg3: memref<32x1xf32, #tpu.memory_space<vmem>>, %arg4: memref<32x1xf32, #tpu.memory_space<vmem>>, %arg5: memref<64x32xf32, #tpu.memory_space<vmem>>, %arg6: memref<64x1xf32, #tpu.memory_space<vmem>>, %arg7: memref<64x64xf32, #tpu.memory_space<vmem>>, %arg8: memref<64x1xf32, #tpu.memory_space<vmem>>, %arg9: memref<1x64x256xf32, #tpu.memory_space<vmem>>) attributes {dimension_semantics = [#tpu.dimension_semantics<parallel>, #tpu.dimension_semantics<parallel>], iteration_bounds = array<i64: 2, 1>, scalar_prefetch = 0 : i64, scratch_operands = 0 : i64, tpu.core_type = #tpu.core_type<tc>, window_params = [{transform_indices = @transform_0, window_bounds = array<i64: 1, 1, 256>}, {pipeline_mode = #tpu.pipeline_mode<synchronous>, transform_indices = @transform_1, window_bounds = array<i64: 32, 1>}, {pipeline_mode = #tpu.pipeline_mode<synchronous>, transform_indices = @transform_2, window_bounds = array<i64: 32, 1>}, {pipeline_mode = #tpu.pipeline_mode<synchronous>, transform_indices = @transform_3, window_bounds = array<i64: 64, 32>}, {pipeline_mode = #tpu.pipeline_mode<synchronous>, transform_indices = @transform_4, window_bounds = array<i64: 64, 1>}, {pipeline_mode = #tpu.pipeline_mode<synchronous>, transform_indices = @transform_5, window_bounds = array<i64: 64, 64>}, {pipeline_mode = #tpu.pipeline_mode<synchronous>, transform_indices = @transform_6, window_bounds = array<i64: 64, 1>}, {transform_indices = @transform_7, window_bounds = array<i64: 1, 64, 256>}]} {
    %c0 = arith.constant 0 : index
    %c0_0 = arith.constant 0 : index
    %0 = vector.load %arg3[%c0, %c0_0] : memref<32x1xf32, #tpu.memory_space<vmem>>, vector<32x1xf32>
    %c0_1 = arith.constant 0 : index
    %c0_2 = arith.constant 0 : index
    %1 = vector.load %arg4[%c0_1, %c0_2] : memref<32x1xf32, #tpu.memory_space<vmem>>, vector<32x1xf32>
    %c0_3 = arith.constant 0 : index
    %c0_4 = arith.constant 0 : index
    %2 = vector.load %arg5[%c0_3, %c0_4] : memref<64x32xf32, #tpu.memory_space<vmem>>, vector<64x32xf32>
    %c0_5 = arith.constant 0 : index
    %c0_6 = arith.constant 0 : index
    %3 = vector.load %arg6[%c0_5, %c0_6] : memref<64x1xf32, #tpu.memory_space<vmem>>, vector<64x1xf32>
    %c0_7 = arith.constant 0 : index
    %c0_8 = arith.constant 0 : index
    %4 = vector.load %arg7[%c0_7, %c0_8] : memref<64x64xf32, #tpu.memory_space<vmem>>, vector<64x64xf32>
    %c0_9 = arith.constant 0 : index
    %c0_10 = arith.constant 0 : index
    %5 = vector.load %arg8[%c0_9, %c0_10] : memref<64x1xf32, #tpu.memory_space<vmem>>, vector<64x1xf32>
    %c0_11 = arith.constant 0 : index
    %c0_12 = arith.constant 0 : index
    %c0_13 = arith.constant 0 : index
    %6 = vector.load %arg2[%c0_11, %c0_12, %c0_13] : memref<1x1x256xf32, #tpu.memory_space<vmem>>, vector<1x1x256xf32>
    %7 = vector.shape_cast %6 : vector<1x1x256xf32> to vector<1x256xf32>
    %8 = vector.broadcast %0 : vector<32x1xf32> to vector<32x256xf32>
    %9 = vector.broadcast %7 : vector<1x256xf32> to vector<32x256xf32>
    %10 = arith.mulf %8, %9 : vector<32x256xf32>
    %11 = vector.broadcast %1 : vector<32x1xf32> to vector<32x256xf32>
    %12 = arith.addf %10, %11 : vector<32x256xf32>
    %13 = math.tanh %12 : vector<32x256xf32>
    %cst = arith.constant dense<0.000000e+00> : vector<64x256xf32>
    %14 = tpu.matmul %2, %13, %cst {dimension_numbers = #tpu.dot_dimension_numbers<[1], [0], [0], [1], [0, 0, 1, 1], [], []>} : vector<64x32xf32>, vector<32x256xf32>, vector<64x256xf32> -> vector<64x256xf32>
    %15 = vector.broadcast %3 : vector<64x1xf32> to vector<64x256xf32>
    %16 = arith.addf %14, %15 : vector<64x256xf32>
    %17 = math.tanh %16 : vector<64x256xf32>
    %cst_14 = arith.constant dense<0.000000e+00> : vector<64x256xf32>
    %18 = tpu.matmul %4, %17, %cst_14 {dimension_numbers = #tpu.dot_dimension_numbers<[1], [0], [0], [1], [0, 0, 1, 1], [], []>} : vector<64x64xf32>, vector<64x256xf32>, vector<64x256xf32> -> vector<64x256xf32>
    %19 = vector.broadcast %5 : vector<64x1xf32> to vector<64x256xf32>
    %20 = arith.addf %18, %19 : vector<64x256xf32>
    %c0_15 = arith.constant 0 : index
    %c0_16 = arith.constant 0 : index
    %c0_17 = arith.constant 0 : index
    %21 = vector.load %arg9[%c0_15, %c0_16, %c0_17] : memref<1x64x256xf32, #tpu.memory_space<vmem>>, vector<1x64x256xf32>
    %22 = vector.shape_cast %21 : vector<1x64x256xf32> to vector<64x256xf32>
    %23 = vector.shape_cast %20 : vector<64x256xf32> to vector<1x64x256xf32>
    tpu.vector_store %arg9[%c0_15, %c0_16, %c0_17], %23 {strides = array<i32>} : memref<1x64x256xf32, #tpu.memory_space<vmem>>, vector<1x64x256xf32>,
    return
  }
  func.func @transform_0(%arg0: i32, %arg1: i32) -> (i32, i32, i32) {
    %c0_i32 = arith.constant 0 : i32
    %c0_i32_0 = arith.constant 0 : i32
    return %arg0, %c0_i32, %arg1 : i32, i32, i32
  }
  func.func @transform_1(%arg0: i32, %arg1: i32) -> (i32, i32) {
    %c0_i32 = arith.constant 0 : i32
    %c0_i32_0 = arith.constant 0 : i32
    %c0_i32_1 = arith.constant 0 : i32
    return %c0_i32, %c0_i32_0 : i32, i32
  }
  func.func @transform_2(%arg0: i32, %arg1: i32) -> (i32, i32) {
    %c0_i32 = arith.constant 0 : i32
    %c0_i32_0 = arith.constant 0 : i32
    %c0_i32_1 = arith.constant 0 : i32
    return %c0_i32, %c0_i32_0 : i32, i32
  }
  func.func @transform_3(%arg0: i32, %arg1: i32) -> (i32, i32) {
    %c0_i32 = arith.constant 0 : i32
    %c0_i32_0 = arith.constant 0 : i32
    %c0_i32_1 = arith.constant 0 : i32
    return %c0_i32, %c0_i32_0 : i32, i32
  }
  func.func @transform_4(%arg0: i32, %arg1: i32) -> (i32, i32) {
    %c0_i32 = arith.constant 0 : i32
    %c0_i32_0 = arith.constant 0 : i32
    %c0_i32_1 = arith.constant 0 : i32
    return %c0_i32, %c0_i32_0 : i32, i32
  }
  func.func @transform_5(%arg0: i32, %arg1: i32) -> (i32, i32) {
    %c0_i32 = arith.constant 0 : i32
    %c0_i32_0 = arith.constant 0 : i32
    %c0_i32_1 = arith.constant 0 : i32
    return %c0_i32, %c0_i32_0 : i32, i32
  }
  func.func @transform_6(%arg0: i32, %arg1: i32) -> (i32, i32) {
    %c0_i32 = arith.constant 0 : i32
    %c0_i32_0 = arith.constant 0 : i32
    %c0_i32_1 = arith.constant 0 : i32
    return %c0_i32, %c0_i32_0 : i32, i32
  }
  func.func @transform_7(%arg0: i32, %arg1: i32) -> (i32, i32, i32) {
    %c0_i32 = arith.constant 0 : i32
    %c0_i32_0 = arith.constant 0 : i32
    return %arg0, %c0_i32, %arg1 : i32, i32, i32
  }
}

</mosaic_0001>

<llo_original>
// kernel: model_tanh_forward.1
$region0: #{model_tanh_forward.1}
  #allocation0 [shape = 'u32[]', space=smem, size = 0x4, offset = 0x4, fixed_abs, tag = 'smem constant byte address 0x4 - core index']
  #allocation1 [shape = 'u32[144,128]{1,0:T(1,128)}', space=vmem, size = 0x12000, scoped, tag = 'internal scratch']
  %s0 = inlined_call_operand.vmem [shape: f32[2,1,256], index: 0, kind: input, shape index: {}]
  %s1 = inlined_call_operand.vmem [shape: f32[32,1], index: 1, kind: input, shape index: {}]
  %s2 = inlined_call_operand.vmem [shape: f32[32,1], index: 2, kind: input, shape index: {}]
  %s3 = inlined_call_operand.vmem [shape: f32[64,32], index: 3, kind: input, shape index: {}]
  %s4 = inlined_call_operand.vmem [shape: f32[64,1], index: 4, kind: input, shape index: {}]
  %s5 = inlined_call_operand.vmem [shape: f32[64,64], index: 5, kind: input, shape index: {}]
  %s6 = inlined_call_operand.vmem [shape: f32[64,1], index: 6, kind: input, shape index: {}]
  %s7 = inlined_call_operand.vmem [shape: f32[2,64,256], index: 7, kind: output, shape index: {}]
  %s8 = sld [smem:[#allocation0]]
  $region61: #{model_tanh_forward.1} parent=0
    _
  %s10 = ssub.s32 1, %s8
  %s11 = scalar_select 0, %s10, %s8
  loop: start=0, step=1, limit=4
  $region2: #{model_tanh_forward.1} parent=0 // loop_pre_header
    _
  $region3: #{model_tanh_forward.1} parent=0 // loop_header
    %s13 = sphi 0, %s17
    %p14 = scmp.ge.s32.totalorder %s13, 4
    %s20 = sphi 0, %s32
    %s21 = sphi 0, %s28
    %s22 = sphi 0, %s20
    %s23 = sphi 0, %s21
    %s24 = sphi 0, %s22
    %s25 = sphi 0, %s23
    %s37 = sphi 0, %s39
    %s40 = sphi 0, %s37
    %s41 = sphi 0, %s40
    %s57 = sphi 0, %s41
    %s61 = sphi 0, %s61
    %s63 = sphi 0, %s61
    %s64 = sphi 0, %s63
    %s78 = sphi 0, %s64
    %s82 = sphi 0, %s82
    %s84 = sphi 0, %s82
    %s85 = sphi 0, %s84
    %s99 = sphi 0, %s85
    %s103 = sphi 0, %s103
    %s105 = sphi 0, %s103
    %s106 = sphi 0, %s105
    %s120 = sphi 0, %s106
    %s124 = sphi 0, %s124
    %s126 = sphi 0, %s124
    %s127 = sphi 0, %s126
    %s141 = sphi 0, %s127
    %s145 = sphi 0, %s145
    %s147 = sphi 0, %s145
    %s148 = sphi 0, %s147
    %s162 = sphi 0, %s148
    %s166 = sphi 0, %s166
    %s168 = sphi 0, %s166
    %s169 = sphi 0, %s168
    %s183 = sphi 0, %s169
    %s191 = sphi 0, %s193
    %s194 = sphi 0, %s191
    %s195 = sphi 0, %s194
    %s211 = sphi 0, %s195
  $region4: #{model_tanh_forward.1} parent=0 // loop_header_branch
    %16 = sbr.rel (%p14) target = $region8
  $region5: #{model_tanh_forward.1} parent=0 // loop_body
    %s18 = ssub.s32 %s13, 1
    %s19 = ssub.s32 %s13, 2
    %s26 = sadd.s32 1, %s21
    %p27 = scmp.ge.s32.totalorder %s26, 1
    %s28 = scalar_select %p27, 0, %s26
    %s29 = sadd.s32 1, %s20
    %s30 = scalar_select %p27, %s29, %s20
    %p31 = scmp.ge.s32.totalorder %s30, 2
    %s32 = scalar_select %p31, 0, %s30
    %s33 = ssub.s32 %s20, %s32
    %s34 = ssub.s32 %s21, %s28
    %s35 = sor.u32 %s33, %s34
    %p36 = scmp.eq.s32.totalorder %s35, 0
    %s38 = sadd.s32 %s37, 1
    %s39 = scalar_select %p36, %s37, %s38
    %p42 = pneg %p36
    %p43 = scmp.eq.s32.totalorder %s13, 1
    %p44 = por %p42, %p43
    %p45 = scmp.ne.s32.totalorder %s37, %s40
    %p46 = scmp.eq.s32.totalorder %s13, 0
    %p47 = por %p45, %p46
    %p48 = scmp.ne.s32.totalorder %s37, %s40
    %p49 = scmp.eq.s32.totalorder %s18, 1
    %p50 = por %p48, %p49
    %p51 = scmp.ne.s32.totalorder %s40, %s41
    %p52 = scmp.eq.s32.totalorder %s18, 0
    %p53 = por %p51, %p52
    %p54 = scmp.ne.s32.totalorder %s40, %s41
    %p55 = scmp.eq.s32.totalorder %s19, 1
    %p56 = por %p54, %p55
    %p58 = scmp.ne.s32.totalorder %s41, %s57
    %p59 = scmp.eq.s32.totalorder %s19, 0
    %p60 = por %p58, %p59
    %s62 = sadd.s32 %s61, 1
    %p65 = scmp.eq.s32.totalorder %s13, 1
    %p66 = scmp.ne.s32.totalorder %s61, %s63
    %p67 = scmp.eq.s32.totalorder %s13, 0
    %p68 = por %p66, %p67
    %p69 = scmp.ne.s32.totalorder %s61, %s63
    %p70 = scmp.eq.s32.totalorder %s18, 1
    %p71 = por %p69, %p70
    %p72 = scmp.ne.s32.totalorder %s63, %s64
    %p73 = scmp.eq.s32.totalorder %s18, 0
    %p74 = por %p72, %p73
    %p75 = scmp.ne.s32.totalorder %s63, %s64
    %p76 = scmp.eq.s32.totalorder %s19, 1
    %p77 = por %p75, %p76
    %p79 = scmp.ne.s32.totalorder %s64, %s78
    %p80 = scmp.eq.s32.totalorder %s19, 0
    %p81 = por %p79, %p80
    %s83 = sadd.s32 %s82, 1
    %p86 = scmp.eq.s32.totalorder %s13, 1
    %p87 = scmp.ne.s32.totalorder %s82, %s84
    %p88 = scmp.eq.s32.totalorder %s13, 0
    %p89 = por %p87, %p88
    %p90 = scmp.ne.s32.totalorder %s82, %s84
    %p91 = scmp.eq.s32.totalorder %s18, 1
    %p92 = por %p90, %p91
    %p93 = scmp.ne.s32.totalorder %s84, %s85
    %p94 = scmp.eq.s32.totalorder %s18, 0
    %p95 = por %p93, %p94
    %p96 = scmp.ne.s32.totalorder %s84, %s85
    %p97 = scmp.eq.s32.totalorder %s19, 1
    %p98 = por %p96, %p97
    %p100 = scmp.ne.s32.totalorder %s85, %s99
    %p101 = scmp.eq.s32.totalorder %s19, 0
    %p102 = por %p100, %p101
    %s104 = sadd.s32 %s103, 1
    %p107 = scmp.eq.s32.totalorder %s13, 1
    %p108 = scmp.ne.s32.totalorder %s103, %s105
    %p109 = scmp.eq.s32.totalorder %s13, 0
    %p110 = por %p108, %p109
    %p111 = scmp.ne.s32.totalorder %s103, %s105
    %p112 = scmp.eq.s32.totalorder %s18, 1
    %p113 = por %p111, %p112
    %p114 = scmp.ne.s32.totalorder %s105, %s106
    %p115 = scmp.eq.s32.totalorder %s18, 0
    %p116 = por %p114, %p115
    %p117 = scmp.ne.s32.totalorder %s105, %s106
    %p118 = scmp.eq.s32.totalorder %s19, 1
    %p119 = por %p117, %p118
    %p121 = scmp.ne.s32.totalorder %s106, %s120
    %p122 = scmp.eq.s32.totalorder %s19, 0
    %p123 = por %p121, %p122
    %s125 = sadd.s32 %s124, 1
    %p128 = scmp.eq.s32.totalorder %s13, 1
    %p129 = scmp.ne.s32.totalorder %s124, %s126
    %p130 = scmp.eq.s32.totalorder %s13, 0
    %p131 = por %p129, %p130
    %p132 = scmp.ne.s32.totalorder %s124, %s126
    %p133 = scmp.eq.s32.totalorder %s18, 1
    %p134 = por %p132, %p133
    %p135 = scmp.ne.s32.totalorder %s126, %s127
    %p136 = scmp.eq.s32.totalorder %s18, 0
    %p137 = por %p135, %p136
    %p138 = scmp.ne.s32.totalorder %s126, %s127
    %p139 = scmp.eq.s32.totalorder %s19, 1
    %p140 = por %p138, %p139
    %p142 = scmp.ne.s32.totalorder %s127, %s141
    %p143 = scmp.eq.s32.totalorder %s19, 0
    %p144 = por %p142, %p143
    %s146 = sadd.s32 %s145, 1
    %p149 = scmp.eq.s32.totalorder %s13, 1
    %p150 = scmp.ne.s32.totalorder %s145, %s147
    %p151 = scmp.eq.s32.totalorder %s13, 0
    %p152 = por %p150, %p151
    %p153 = scmp.ne.s32.totalorder %s145, %s147
    %p154 = scmp.eq.s32.totalorder %s18, 1
    %p155 = por %p153, %p154
    %p156 = scmp.ne.s32.totalorder %s147, %s148
    %p157 = scmp.eq.s32.totalorder %s18, 0
    %p158 = por %p156, %p157
    %p159 = scmp.ne.s32.totalorder %s147, %s148
    %p160 = scmp.eq.s32.totalorder %s19, 1
    %p161 = por %p159, %p160
    %p163 = scmp.ne.s32.totalorder %s148, %s162
    %p164 = scmp.eq.s32.totalorder %s19, 0
    %p165 = por %p163, %p164
    %s167 = sadd.s32 %s166, 1
    %p170 = scmp.eq.s32.totalorder %s13, 1
    %p171 = scmp.ne.s32.totalorder %s166, %s168
    %p172 = scmp.eq.s32.totalorder %s13, 0
    %p173 = por %p171, %p172
    %p174 = scmp.ne.s32.totalorder %s166, %s168
    %p175 = scmp.eq.s32.totalorder %s18, 1
    %p176 = por %p174, %p175
    %p177 = scmp.ne.s32.totalorder %s168, %s169
    %p178 = scmp.eq.s32.totalorder %s18, 0
    %p179 = por %p177, %p178
    %p180 = scmp.ne.s32.totalorder %s168, %s169
    %p181 = scmp.eq.s32.totalorder %s19, 1
    %p182 = por %p180, %p181
    %p184 = scmp.ne.s32.totalorder %s169, %s183
    %p185 = scmp.eq.s32.totalorder %s19, 0
    %p186 = por %p184, %p185
    %s187 = ssub.s32 %s20, %s32
    %s188 = ssub.s32 %s21, %s28
    %s189 = sor.u32 %s187, %s188
    %p190 = scmp.eq.s32.totalorder %s189, 0
    %s192 = sadd.s32 %s191, 1
    %s193 = scalar_select %p190, %s191, %s192
    %p196 = pneg %p190
    %p197 = scmp.eq.s32.totalorder %s13, 1
    %p198 = por %p196, %p197
    %p199 = scmp.ne.s32.totalorder %s191, %s194
    %p200 = scmp.eq.s32.totalorder %s13, 0
    %p201 = por %p199, %p200
    %p202 = scmp.ne.s32.totalorder %s191, %s194
    %p203 = scmp.eq.s32.totalorder %s18, 1
    %p204 = por %p202, %p203
    %p205 = scmp.ne.s32.totalorder %s194, %s195
    %p206 = scmp.eq.s32.totalorder %s18, 0
    %p207 = por %p205, %p206
    %p208 = scmp.ne.s32.totalorder %s194, %s195
    %p209 = scmp.eq.s32.totalorder %s19, 1
    %p210 = por %p208, %p209
    %p212 = scmp.ne.s32.totalorder %s195, %s211
    %p213 = scmp.eq.s32.totalorder %s19, 0
    %p214 = por %p212, %p213
    %p215 = scmp.le.s32.totalorder 1, %s13
    %p216 = scmp.lt.s32.totalorder %s13, 3
    %p217 = pnand %p215, %p216
    %p218 = pneg %p217
    // Predicated region
    $region9: #{model_tanh_forward.1} parent=5 // pred_check
      _
    $region10: #{model_tanh_forward.1} parent=5 // pred_check_branch
      %220 = sbr.rel (%p217) target = $region12
    $region11: #{model_tanh_forward.1} parent=5 // pred_region
      %s221 = ssub.s32 %s13, 1
      // Predicated region
      $region13: #{model_tanh_forward.1} parent=11 // pred_check
        %p222 = pneg %p74
      $region14: #{model_tanh_forward.1} parent=11 // pred_check_branch
        %224 = sbr.rel (%p222) target = $region16
      $region15: #{model_tanh_forward.1} parent=11 // pred_region
        _
      $region16: #{model_tanh_forward.1} parent=11 // pred_fallthru
        _
      // Predicated region
      $region17: #{model_tanh_forward.1} parent=11 // pred_check
        %p225 = pneg %p95
      $region18: #{model_tanh_forward.1} parent=11 // pred_check_branch
        %227 = sbr.rel (%p225) target = $region20
      $region19: #{model_tanh_forward.1} parent=11 // pred_region
        _
      $region20: #{model_tanh_forward.1} parent=11 // pred_fallthru
        _
      // Predicated region
      $region21: #{model_tanh_forward.1} parent=11 // pred_check
        %p228 = pneg %p116
      $region22: #{model_tanh_forward.1} parent=11 // pred_check_branch
        %230 = sbr.rel (%p228) target = $region24
      $region23: #{model_tanh_forward.1} parent=11 // pred_region
        _
      $region24: #{model_tanh_forward.1} parent=11 // pred_fallthru
        _
      // Predicated region
      $region25: #{model_tanh_forward.1} parent=11 // pred_check
        %p231 = pneg %p137
      $region26: #{model_tanh_forward.1} parent=11 // pred_check_branch
        %233 = sbr.rel (%p231) target = $region28
      $region27: #{model_tanh_forward.1} parent=11 // pred_region
        _
      $region28: #{model_tanh_forward.1} parent=11 // pred_fallthru
        _
      // Predicated region
      $region29: #{model_tanh_forward.1} parent=11 // pred_check
        %p234 = pneg %p158
      $region30: #{model_tanh_forward.1} parent=11 // pred_check_branch
        %236 = sbr.rel (%p234) target = $region32
      $region31: #{model_tanh_forward.1} parent=11 // pred_region
        _
      $region32: #{model_tanh_forward.1} parent=11 // pred_fallthru
        _
      // Predicated region
      $region33: #{model_tanh_forward.1} parent=11 // pred_check
        %p237 = pneg %p179
      $region34: #{model_tanh_forward.1} parent=11 // pred_check_branch
        %239 = sbr.rel (%p237) target = $region36
      $region35: #{model_tanh_forward.1} parent=11 // pred_region
        _
      $region36: #{model_tanh_forward.1} parent=11 // pred_fallthru
        _
    $region12: #{model_tanh_forward.1} parent=5 // pred_fallthru
      _
    %p240 = scmp.lt.s32.totalorder %s13, 2
    // Predicated region
    $region37: #{model_tanh_forward.1} parent=5 // pred_check
      %p241 = pneg %p240
    $region38: #{model_tanh_forward.1} parent=5 // pred_check_branch
      %243 = sbr.rel (%p241) target = $region40
    $region39: #{model_tanh_forward.1} parent=5 // pred_region
      // Predicated region
      $region41: #{model_tanh_forward.1} parent=39 // pred_check
        %p244 = pneg %p47
      $region42: #{model_tanh_forward.1} parent=39 // pred_check_branch
        %246 = sbr.rel (%p244) target = $region44
      $region43: #{model_tanh_forward.1} parent=39 // pred_region
        %s247 = smul.u32 2, %s21
        %p248 = scmp.lt.s32.totalorder %s20, 1
        %s249 = scalar_select %p248, %s20, 1
        %p250 = scmp.lt.s32.totalorder %s247, 1
        %s251 = scalar_select %p250, %s247, 1
        %s252 = smul.addr %s249, 2
        %s253 = sadd.s32 %s251, %s252
        %s254 = scalar_lea.vmem %s0, %s253
        %s255 = smul.u32 2, %s21
      $region44: #{model_tanh_forward.1} parent=39 // pred_fallthru
        _
    $region40: #{model_tanh_forward.1} parent=5 // pred_fallthru
      _
    %p256 = scmp.le.s32.totalorder 1, %s13
    %p257 = scmp.lt.s32.totalorder %s13, 3
    %p258 = pnand %p256, %p257
    %p259 = pneg %p258
    // Predicated region
    $region45: #{model_tanh_forward.1} parent=5 // pred_check
      _
    $region46: #{model_tanh_forward.1} parent=5 // pred_check_branch
      %261 = sbr.rel (%p258) target = $region48
    $region47: #{model_tanh_forward.1} parent=5 // pred_region
      %s262 = ssub.s32 %s13, 1
      %s263 = smul.u32 2, %s23
      %p264 = scmp.lt.s32.totalorder %s22, 1
      %s265 = scalar_select %p264, %s22, 1
      %p266 = scmp.lt.s32.totalorder %s263, 1
      %s267 = scalar_select %p266, %s263, 1
      %s268 = smul.addr %s265, 2
      %s269 = sadd.s32 %s267, %s268
      %s270 = scalar_lea.vmem %s0, %s269
      %p271 = pneg %p53
      %p272 = pneg %p50
      %p273 = pneg %p74
      %p274 = pneg %p71
      %p275 = pneg %p95
      %p276 = pneg %p92
      %p277 = pneg %p116
      %p278 = pneg %p113
      %p279 = pneg %p137
      %p280 = pneg %p134
      %p281 = pneg %p158
      %p282 = pneg %p155
      %p283 = pneg %p179
      %p284 = pneg %p176
      %p285 = pneg %p207
      %p286 = pneg %p204
      %s287 = smul.u32 2, %s23
      %p288 = scmp.lt.s32.totalorder %s22, 1
      %s289 = scalar_select %p288, %s22, 1
      %p290 = scmp.lt.s32.totalorder %s287, 1
      %s291 = scalar_select %p290, %s287, 1
      %s292 = smul.addr %s289, 16
      %s293 = sadd.s32 %s291, %s292
      %s294 = smul.addr %s293, 8
      %s295 = scalar_lea.vmem %s7, %s294
      %s296 = smul.u32 2, %s23
      %p297 = scmp.lt.s32.totalorder %s22, 1
      %s298 = scalar_select %p297, %s22, 1
      %p299 = scmp.lt.s32.totalorder %s296, 1
      %s300 = scalar_select %p299, %s296, 1
      %s301 = smul.addr %s298, 2
      %s302 = sadd.s32 %s300, %s301
      %s303 = scalar_lea.vmem %s0, %s302
      %s304 = smul.u32 2, %s23
      %s305 = smul.u32 2, %s23
      %p306 = scmp.lt.s32.totalorder %s22, 1
      %s307 = scalar_select %p306, %s22, 1
      %p308 = scmp.lt.s32.totalorder %s305, 1
      %s309 = scalar_select %p308, %s305, 1
      %s310 = smul.addr %s307, 16
      %s311 = sadd.s32 %s309, %s310
      %s312 = smul.addr %s311, 8
      %s313 = scalar_lea.vmem %s7, %s312
      %s314 = smul.u32 2, %s23
      %v315 = vld [vmem:[%s1] sm:$0xff]
      %v316 = vld [vmem:[%s1 + $0x8] sm:$0xff]
      %v317 = vld [vmem:[%s1 + $0x10] sm:$0xff]
      %v318 = vld [vmem:[%s1 + $0x18] sm:$0xff]
      %v319 = vld [vmem:[%s2] sm:$0xff]
      %v320 = vld [vmem:[%s2 + $0x8] sm:$0xff]
      %v321 = vld [vmem:[%s2 + $0x10] sm:$0xff]
      %v322 = vld [vmem:[%s2 + $0x18] sm:$0xff]
      %v323 = vld [vmem:[%s3] sm:$0xff]
      %v324 = vld [vmem:[%s3 + $0x8] sm:$0xff]
      %v325 = vld [vmem:[%s3 + $0x10] sm:$0xff]
      %v326 = vld [vmem:[%s3 + $0x18] sm:$0xff]
      %v327 = vld [vmem:[%s3 + $0x20] sm:$0xff]
      %v328 = vld [vmem:[%s3 + $0x28] sm:$0xff]
      %v329 = vld [vmem:[%s3 + $0x30] sm:$0xff]
      %v330 = vld [vmem:[%s3 + $0x38] sm:$0xff]
      %v331 = vld [vmem:[%s4] sm:$0xff]
      %v332 = vld [vmem:[%s4 + $0x8] sm:$0xff]
      %v333 = vld [vmem:[%s4 + $0x10] sm:$0xff]
      %v334 = vld [vmem:[%s4 + $0x18] sm:$0xff]
      %v335 = vld [vmem:[%s4 + $0x20] sm:$0xff]
      %v336 = vld [vmem:[%s4 + $0x28] sm:$0xff]
      %v337 = vld [vmem:[%s4 + $0x30] sm:$0xff]
      %v338 = vld [vmem:[%s4 + $0x38] sm:$0xff]
      %v339 = vld [vmem:[%s5] sm:$0xff]
      %v340 = vld [vmem:[%s5 + $0x8] sm:$0xff]
      %v341 = vld [vmem:[%s5 + $0x10] sm:$0xff]
      %v342 = vld [vmem:[%s5 + $0x18] sm:$0xff]
      %v343 = vld [vmem:[%s5 + $0x20] sm:$0xff]
      %v344 = vld [vmem:[%s5 + $0x28] sm:$0xff]
      %v345 = vld [vmem:[%s5 + $0x30] sm:$0xff]
      %v346 = vld [vmem:[%s5 + $0x38] sm:$0xff]
      %v347 = vld [vmem:[%s6] sm:$0xff]
      %v348 = vld [vmem:[%s6 + $0x8] sm:$0xff]
      %v349 = vld [vmem:[%s6 + $0x10] sm:$0xff]
      %v350 = vld [vmem:[%s6 + $0x18] sm:$0xff]
      %v351 = vld [vmem:[%s6 + $0x20] sm:$0xff]
      %v352 = vld [vmem:[%s6 + $0x28] sm:$0xff]
      %v353 = vld [vmem:[%s6 + $0x30] sm:$0xff]
      %v354 = vld [vmem:[%s6 + $0x38] sm:$0xff]
      %v355 = vld [vmem:[%s303] sm:$0x3]
      %357 = vset.pattern.permute.xlu0 0
      %358 = vperm.xlu0 %357, %v315
      %v359 = vpop.permute.xlu0 %358
      %362 = vset.pattern.permute.xlu0 0
      %363 = vperm.xlu0 %362, %v316
      %v364 = vpop.permute.xlu0 %363
      %367 = vset.pattern.permute.xlu0 0
      %368 = vperm.xlu0 %367, %v317
      %v369 = vpop.permute.xlu0 %368
      %372 = vset.pattern.permute.xlu0 0
      %373 = vperm.xlu0 %372, %v318
      %v374 = vpop.permute.xlu0 %373
      %v377 = vlaneseq
      %v378 = vshrl.u32 %v377, 7
      %v379 = vsub.s32 0, %v378
      %v380 = vrot.slane %v355, %v379
      %v381 = vlaneseq
      %v382 = vshrl.u32 %v381, 7
      %v383 = vsub.s32 1, %v382
      %v384 = vrot.slane %v355, %v383
      %v387 = vmul.f32 %v359, %v380
      %v388 = vmul.f32 %v359, %v384
      %v389 = vmul.f32 %v364, %v380
      %v390 = vmul.f32 %v364, %v384
      %v391 = vmul.f32 %v369, %v380
      %v392 = vmul.f32 %v369, %v384
      %v393 = vmul.f32 %v374, %v380
      %v394 = vmul.f32 %v374, %v384
      %396 = vset.pattern.permute.xlu0 0
      %397 = vperm.xlu0 %396, %v319
      %v398 = vpop.permute.xlu0 %397
      %401 = vset.pattern.permute.xlu0 0
      %402 = vperm.xlu0 %401, %v320
      %v403 = vpop.permute.xlu0 %402
      %406 = vset.pattern.permute.xlu0 0
      %407 = vperm.xlu0 %406, %v321
      %v408 = vpop.permute.xlu0 %407
      %411 = vset.pattern.permute.xlu0 0
      %412 = vperm.xlu0 %411, %v322
      %v413 = vpop.permute.xlu0 %412
      %v415 = vadd.f32 %v387, %v398
      %v416 = vadd.f32 %v388, %v398
      %v417 = vadd.f32 %v389, %v403
      %v418 = vadd.f32 %v390, %v403
      %v419 = vadd.f32 %v391, %v408
      %v420 = vadd.f32 %v392, %v408
      %v421 = vadd.f32 %v393, %v413
      %v422 = vadd.f32 %v394, %v413
      %v423 = vtanh.pop %v415
      %v424 = vtanh.pop %v416
      %v425 = vtanh.pop %v417
      %v426 = vtanh.pop %v418
      %v427 = vtanh.pop %v419
      %v428 = vtanh.pop %v420
      %v429 = vtanh.pop %v421
      %v430 = vtanh.pop %v422
      %432 = vset.pattern.permute.xlu0 0
      %433 = vperm.xlu0 %432, %v331
      %v434 = vpop.permute.xlu0 %433
      %437 = vset.pattern.permute.xlu0 0
      %438 = vperm.xlu0 %437, %v332
      %v439 = vpop.permute.xlu0 %438
      %442 = vset.pattern.permute.xlu0 0
      %443 = vperm.xlu0 %442, %v333
      %v444 = vpop.permute.xlu0 %443
      %447 = vset.pattern.permute.xlu0 0
      %448 = vperm.xlu0 %447, %v334
      %v449 = vpop.permute.xlu0 %448
      %452 = vset.pattern.permute.xlu0 0
      %453 = vperm.xlu0 %452, %v335
      %v454 = vpop.permute.xlu0 %453
      %457 = vset.pattern.permute.xlu0 0
      %458 = vperm.xlu0 %457, %v336
      %v459 = vpop.permute.xlu0 %458
      %462 = vset.pattern.permute.xlu0 0
      %463 = vperm.xlu0 %462, %v337
      %v464 = vpop.permute.xlu0 %463
      %467 = vset.pattern.permute.xlu0 0
      %468 = vperm.xlu0 %467, %v338
      %v469 = vpop.permute.xlu0 %468
      %vm471 = vcmask 261120
      %v473 = vsel %vm471, %v323, 0
      %v476 = vsel %vm471, %v324, 0
      %v479 = vsel %vm471, %v325, 0
      %v482 = vsel %vm471, %v326, 0
      %v485 = vsel %vm471, %v327, 0
      %v488 = vsel %vm471, %v328, 0
      %v491 = vsel %vm471, %v329, 0
      %v494 = vsel %vm471, %v330, 0
      %496 = vmatprep.subr.mxu0 0.0
      %497 = vmatpush1.msra.mxu0 0.0
      %498 = vmatprep.subr.mxu0 0.0
      %499 = vmatpush1.msra.mxu0 0.0
      %500 = vmatprep.subr.mxu0 0.0
      %501 = vmatpush1.msra.mxu0 0.0
      %502 = vmatprep.subr.mxu0 0.0
      %503 = vmatpush1.msra.mxu0 0.0
      %504 = vmatprep.subr.mxu0 0.0
      %505 = vmatpush1.msra.mxu0 0.0
      %506 = vmatprep.subr.mxu0 0.0
      %507 = vmatpush1.msra.mxu0 0.0
      %508 = vmatprep.subr.mxu0 0.0
      %509 = vmatpush1.msra.mxu0 0.0
      %510 = vmatprep.subr.mxu0 0.0
      %511 = vmatpush1.msra.mxu0 0.0
      %512 = vmatprep.subr.mxu0 0.0
      %513 = vmatpush1.msra.mxu0 0.0
      %514 = vmatprep.subr.mxu0 0.0
      %515 = vmatpush1.msra.mxu0 0.0
      %516 = vmatprep.subr.mxu0 0.0
      %517 = vmatpush1.msra.mxu0 0.0
      %518 = vmatprep.subr.mxu0 0.0
      %519 = vmatpush1.msra.mxu0 0.0
      %520 = vmatprep.subr.mxu0 %v430
      %521 = vmatpush1.msra.mxu0 %v429
      %522 = vmatprep.subr.mxu0 %v428
      %523 = vmatpush1.msra.mxu0 %v427
      %524 = vmatprep.subr.mxu0 %v426
      %525 = vmatpush1.msra.mxu0 %v425
      %526 = vmatprep.subr.mxu0 %v424
      %527 = vmatpush1.msra.mxu0 %v423
      %528 = vmatprep.subr.mxu0 0.0
      %529 = vmatpush2.msra.mxu0 0.0
      %530 = vmatprep.subr.mxu0 0.0
      %531 = vmatpush2.msra.mxu0 0.0
      %532 = vmatprep.subr.mxu0 0.0
      %533 = vmatpush2.msra.mxu0 0.0
      %534 = vmatprep.subr.mxu0 0.0
      %535 = vmatpush2.msra.mxu0 0.0
      %536 = vmatprep.subr.mxu0 0.0
      %537 = vmatpush2.msra.mxu0 0.0
      %538 = vmatprep.subr.mxu0 0.0
      %539 = vmatpush2.msra.mxu0 0.0
      %540 = vmatprep.subr.mxu0 0.0
      %541 = vmatpush2.msra.mxu0 0.0
      %542 = vmatprep.subr.mxu0 0.0
      %543 = vmatpush2.msra.mxu0 0.0
      %544 = vmatprep.subr.mxu0 0.0
      %545 = vmatpush2.msra.mxu0 0.0
      %546 = vmatprep.subr.mxu0 0.0
      %547 = vmatpush2.msra.mxu0 0.0
      %548 = vmatprep.subr.mxu0 0.0
      %549 = vmatpush2.msra.mxu0 0.0
      %550 = vmatprep.subr.mxu0 0.0
      %551 = vmatpush2.msra.mxu0 0.0
      %552 = vmatprep.subr.mxu0 0.0
      %553 = vmatpush2.msra.mxu0 0.0
      %554 = vmatprep.subr.mxu0 0.0
      %555 = vmatpush2.msra.mxu0 0.0
      %556 = vmatprep.subr.mxu0 0.0
      %557 = vmatpush2.msra.mxu0 0.0
      %558 = vmatprep.subr.mxu0 0.0
      %559 = vmatpush2.msra.mxu0 0.0
      %560 = vmatprep.mubr.f32.mxu0 0.0
      %561 = vmatmul.mubr.f32.gmra.mxu0 %v473
      %v562 = vpop.f32.mrf.mxu0
      %v563 = vadd.f32 %v434, %v562
      %v564 = vpop.f32.mrf.mxu0
      %v565 = vadd.f32 %v434, %v564
      %566 = vmatprep.mubr.f32.mxu0 0.0
      %567 = vmatmul.mubr.f32.gmra.mxu0 %v476
      %v568 = vpop.f32.mrf.mxu0
      %v569 = vadd.f32 %v439, %v568
      %v570 = vpop.f32.mrf.mxu0
      %v571 = vadd.f32 %v439, %v570
      %572 = vmatprep.mubr.f32.mxu0 0.0
      %573 = vmatmul.mubr.f32.gmra.mxu0 %v479
      %v574 = vpop.f32.mrf.mxu0
      %v575 = vadd.f32 %v444, %v574
      %v576 = vpop.f32.mrf.mxu0
      %v577 = vadd.f32 %v444, %v576
      %578 = vmatprep.mubr.f32.mxu0 0.0
      %579 = vmatmul.mubr.f32.gmra.mxu0 %v482
      %v580 = vpop.f32.mrf.mxu0
      %v581 = vadd.f32 %v449, %v580
      %v582 = vpop.f32.mrf.mxu0
      %v583 = vadd.f32 %v449, %v582
      %584 = vmatprep.mubr.f32.mxu0 0.0
      %585 = vmatmul.mubr.f32.gmra.mxu0 %v485
      %v586 = vpop.f32.mrf.mxu0
      %v587 = vadd.f32 %v454, %v586
      %v588 = vpop.f32.mrf.mxu0
      %v589 = vadd.f32 %v454, %v588
      %590 = vmatprep.mubr.f32.mxu0 0.0
      %591 = vmatmul.mubr.f32.gmra.mxu0 %v488
      %v592 = vpop.f32.mrf.mxu0
      %v593 = vadd.f32 %v459, %v592
      %v594 = vpop.f32.mrf.mxu0
      %v595 = vadd.f32 %v459, %v594
      %596 = vmatprep.mubr.f32.mxu0 0.0
      %597 = vmatmul.mubr.f32.gmra.mxu0 %v491
      %v598 = vpop.f32.mrf.mxu0
      %v599 = vadd.f32 %v464, %v598
      %v600 = vpop.f32.mrf.mxu0
      %v601 = vadd.f32 %v464, %v600
      %602 = vmatprep.mubr.f32.mxu0 0.0
      %603 = vmatmul.mubr.f32.gmra.mxu0 %v494
      %v604 = vpop.f32.mrf.mxu0
      %v605 = vadd.f32 %v469, %v604
      %v606 = vpop.f32.mrf.mxu0
      %v607 = vadd.f32 %v469, %v606
      %608 = vdwg.mxu0
      %v609 = vtanh.pop %v563
      %v610 = vtanh.pop %v565
      %v611 = vtanh.pop %v569
      %v612 = vtanh.pop %v571
      %v613 = vtanh.pop %v575
      %v614 = vtanh.pop %v577
      %v615 = vtanh.pop %v581
      %v616 = vtanh.pop %v583
      %v617 = vtanh.pop %v587
      %v618 = vtanh.pop %v589
      %v619 = vtanh.pop %v593
      %v620 = vtanh.pop %v595
      %v621 = vtanh.pop %v599
      %v622 = vtanh.pop %v601
      %v623 = vtanh.pop %v605
      %v624 = vtanh.pop %v607
      %626 = vset.pattern.permute.xlu0 0
      %627 = vperm.xlu0 %626, %v347
      %v628 = vpop.permute.xlu0 %627
      %631 = vset.pattern.permute.xlu0 0
      %632 = vperm.xlu0 %631, %v348
      %v633 = vpop.permute.xlu0 %632
      %636 = vset.pattern.permute.xlu0 0
      %637 = vperm.xlu0 %636, %v349
      %v638 = vpop.permute.xlu0 %637
      %641 = vset.pattern.permute.xlu0 0
      %642 = vperm.xlu0 %641, %v350
      %v643 = vpop.permute.xlu0 %642
      %646 = vset.pattern.permute.xlu0 0
      %647 = vperm.xlu0 %646, %v351
      %v648 = vpop.permute.xlu0 %647
      %651 = vset.pattern.permute.xlu0 0
      %652 = vperm.xlu0 %651, %v352
      %v653 = vpop.permute.xlu0 %652
      %656 = vset.pattern.permute.xlu0 0
      %657 = vperm.xlu0 %656, %v353
      %v658 = vpop.permute.xlu0 %657
      %661 = vset.pattern.permute.xlu0 0
      %662 = vperm.xlu0 %661, %v354
      %v663 = vpop.permute.xlu0 %662
      %vm665 = vcmask 523264
      %v667 = vsel %vm665, %v339, 0
      %v670 = vsel %vm665, %v340, 0
      %v673 = vsel %vm665, %v341, 0
      %v676 = vsel %vm665, %v342, 0
      %v679 = vsel %vm665, %v343, 0
      %v682 = vsel %vm665, %v344, 0
      %v685 = vsel %vm665, %v345, 0
      %v688 = vsel %vm665, %v346, 0
      %690 = vmatprep.subr.mxu0 0.0
      %691 = vmatpush1.msra.mxu0 0.0
      %692 = vmatprep.subr.mxu0 0.0
      %693 = vmatpush1.msra.mxu0 0.0
      %694 = vmatprep.subr.mxu0 0.0
      %695 = vmatpush1.msra.mxu0 0.0
      %696 = vmatprep.subr.mxu0 0.0
      %697 = vmatpush1.msra.mxu0 0.0
      %698 = vmatprep.subr.mxu0 0.0
      %699 = vmatpush1.msra.mxu0 0.0
      %700 = vmatprep.subr.mxu0 0.0
      %701 = vmatpush1.msra.mxu0 0.0
      %702 = vmatprep.subr.mxu0 0.0
      %703 = vmatpush1.msra.mxu0 0.0
      %704 = vmatprep.subr.mxu0 0.0
      %705 = vmatpush1.msra.mxu0 0.0
      %706 = vmatprep.subr.mxu0 %v624
      %707 = vmatpush1.msra.mxu0 %v623
      %708 = vmatprep.subr.mxu0 %v622
      %709 = vmatpush1.msra.mxu0 %v621
      %710 = vmatprep.subr.mxu0 %v620
      %711 = vmatpush1.msra.mxu0 %v619
      %712 = vmatprep.subr.mxu0 %v618
      %713 = vmatpush1.msra.mxu0 %v617
      %714 = vmatprep.subr.mxu0 %v616
      %715 = vmatpush1.msra.mxu0 %v615
      %716 = vmatprep.subr.mxu0 %v614
      %717 = vmatpush1.msra.mxu0 %v613
      %718 = vmatprep.subr.mxu0 %v612
      %719 = vmatpush1.msra.mxu0 %v611
      %720 = vmatprep.subr.mxu0 %v610
      %721 = vmatpush1.msra.mxu0 %v609
      %722 = vmatprep.subr.mxu0 0.0
      %723 = vmatpush2.msra.mxu0 0.0
      %724 = vmatprep.subr.mxu0 0.0
      %725 = vmatpush2.msra.mxu0 0.0
      %726 = vmatprep.subr.mxu0 0.0
      %727 = vmatpush2.msra.mxu0 0.0
      %728 = vmatprep.subr.mxu0 0.0
      %729 = vmatpush2.msra.mxu0 0.0
      %730 = vmatprep.subr.mxu0 0.0
      %731 = vmatpush2.msra.mxu0 0.0
      %732 = vmatprep.subr.mxu0 0.0
      %733 = vmatpush2.msra.mxu0 0.0
      %734 = vmatprep.subr.mxu0 0.0
      %735 = vmatpush2.msra.mxu0 0.0
      %736 = vmatprep.subr.mxu0 0.0
      %737 = vmatpush2.msra.mxu0 0.0
      %738 = vmatprep.subr.mxu0 0.0
      %739 = vmatpush2.msra.mxu0 0.0
      %740 = vmatprep.subr.mxu0 0.0
      %741 = vmatpush2.msra.mxu0 0.0
      %742 = vmatprep.subr.mxu0 0.0
      %743 = vmatpush2.msra.mxu0 0.0
      %744 = vmatprep.subr.mxu0 0.0
      %745 = vmatpush2.msra.mxu0 0.0
      %746 = vmatprep.subr.mxu0 0.0
      %747 = vmatpush2.msra.mxu0 0.0
      %748 = vmatprep.subr.mxu0 0.0
      %749 = vmatpush2.msra.mxu0 0.0
      %750 = vmatprep.subr.mxu0 0.0
      %751 = vmatpush2.msra.mxu0 0.0
      %752 = vmatprep.subr.mxu0 0.0
      %753 = vmatpush2.msra.mxu0 0.0
      %754 = vmatprep.mubr.f32.mxu0 0.0
      %755 = vmatmul.mubr.f32.gmra.mxu0 %v667
      %v756 = vpop.f32.mrf.mxu0
      %v757 = vadd.f32 %v628, %v756
      %v758 = vpop.f32.mrf.mxu0
      %v759 = vadd.f32 %v628, %v758
      %760 = vmatprep.mubr.f32.mxu0 0.0
      %761 = vmatmul.mubr.f32.gmra.mxu0 %v670
      %v762 = vpop.f32.mrf.mxu0
      %v763 = vadd.f32 %v633, %v762
      %v764 = vpop.f32.mrf.mxu0
      %v765 = vadd.f32 %v633, %v764
      %766 = vmatprep.mubr.f32.mxu0 0.0
      %767 = vmatmul.mubr.f32.gmra.mxu0 %v673
      %v768 = vpop.f32.mrf.mxu0
      %v769 = vadd.f32 %v638, %v768
      %v770 = vpop.f32.mrf.mxu0
      %v771 = vadd.f32 %v638, %v770
      %772 = vmatprep.mubr.f32.mxu0 0.0
      %773 = vmatmul.mubr.f32.gmra.mxu0 %v676
      %v774 = vpop.f32.mrf.mxu0
      %v775 = vadd.f32 %v643, %v774
      %v776 = vpop.f32.mrf.mxu0
      %v777 = vadd.f32 %v643, %v776
      %778 = vmatprep.mubr.f32.mxu0 0.0
      %779 = vmatmul.mubr.f32.gmra.mxu0 %v679
      %v780 = vpop.f32.mrf.mxu0
      %v781 = vadd.f32 %v648, %v780
      %v782 = vpop.f32.mrf.mxu0
      %v783 = vadd.f32 %v648, %v782
      %784 = vmatprep.mubr.f32.mxu0 0.0
      %785 = vmatmul.mubr.f32.gmra.mxu0 %v682
      %v786 = vpop.f32.mrf.mxu0
      %v787 = vadd.f32 %v653, %v786
      %v788 = vpop.f32.mrf.mxu0
      %v789 = vadd.f32 %v653, %v788
      %790 = vmatprep.mubr.f32.mxu0 0.0
      %791 = vmatmul.mubr.f32.gmra.mxu0 %v685
      %v792 = vpop.f32.mrf.mxu0
      %v793 = vadd.f32 %v658, %v792
      %v794 = vpop.f32.mrf.mxu0
      %v795 = vadd.f32 %v658, %v794
      %796 = vmatprep.mubr.f32.mxu0 0.0
      %797 = vmatmul.mubr.f32.gmra.mxu0 %v688
      %v798 = vpop.f32.mrf.mxu0
      %v799 = vadd.f32 %v663, %v798
      %v800 = vpop.f32.mrf.mxu0
      %v801 = vadd.f32 %v663, %v800
      %802 = vdwg.mxu0
      %803 = vst [vmem:[%s313] sm:$0xff] %v757
      %804 = vst [vmem:[%s313 + $0x8] sm:$0xff] %v759
      %805 = vst [vmem:[%s313 + $0x10] sm:$0xff] %v763
      %806 = vst [vmem:[%s313 + $0x18] sm:$0xff] %v765
      %807 = vst [vmem:[%s313 + $0x20] sm:$0xff] %v769
      %808 = vst [vmem:[%s313 + $0x28] sm:$0xff] %v771
      %809 = vst [vmem:[%s313 + $0x30] sm:$0xff] %v775
      %810 = vst [vmem:[%s313 + $0x38] sm:$0xff] %v777
      %811 = vst [vmem:[%s313 + $0x40] sm:$0xff] %v781
      %812 = vst [vmem:[%s313 + $0x48] sm:$0xff] %v783
      %813 = vst [vmem:[%s313 + $0x50] sm:$0xff] %v787
      %814 = vst [vmem:[%s313 + $0x58] sm:$0xff] %v789
      %815 = vst [vmem:[%s313 + $0x60] sm:$0xff] %v793
      %816 = vst [vmem:[%s313 + $0x68] sm:$0xff] %v795
      %817 = vst [vmem:[%s313 + $0x70] sm:$0xff] %v799
      %818 = vst [vmem:[%s313 + $0x78] sm:$0xff] %v801
      %s819 = smul.u32 2, %s23
      %p820 = scmp.lt.s32.totalorder %s22, 1
      %s821 = scalar_select %p820, %s22, 1
      %p822 = scmp.lt.s32.totalorder %s819, 1
      %s823 = scalar_select %p822, %s819, 1
      %s824 = smul.addr %s821, 16
      %s825 = sadd.s32 %s823, %s824
      %s826 = smul.addr %s825, 8
      %s827 = scalar_lea.vmem %s7, %s826
      // Predicated region
      $region49: #{model_tanh_forward.1} parent=47 // pred_check
        %p828 = pneg %p204
      $region50: #{model_tanh_forward.1} parent=47 // pred_check_branch
        %830 = sbr.rel (%p828) target = $region52
      $region51: #{model_tanh_forward.1} parent=47 // pred_region
        %s831 = smul.u32 2, %s23
      $region52: #{model_tanh_forward.1} parent=47 // pred_fallthru
        _
    $region48: #{model_tanh_forward.1} parent=5 // pred_fallthru
      _
    %p832 = scmp.le.s32.totalorder 2, %s13
    // Predicated region
    $region53: #{model_tanh_forward.1} parent=5 // pred_check
      %p833 = pneg %p832
    $region54: #{model_tanh_forward.1} parent=5 // pred_check_branch
      %835 = sbr.rel (%p833) target = $region56
    $region55: #{model_tanh_forward.1} parent=5 // pred_region
      %s836 = ssub.s32 %s13, 2
      // Predicated region
      $region57: #{model_tanh_forward.1} parent=55 // pred_check
        %p837 = pneg %p210
      $region58: #{model_tanh_forward.1} parent=55 // pred_check_branch
        %839 = sbr.rel (%p837) target = $region60
      $region59: #{model_tanh_forward.1} parent=55 // pred_region
        %s840 = smul.u32 2, %s25
        %p841 = scmp.lt.s32.totalorder %s24, 1
        %s842 = scalar_select %p841, %s24, 1
        %p843 = scmp.lt.s32.totalorder %s840, 1
        %s844 = scalar_select %p843, %s840, 1
        %s845 = smul.addr %s842, 16
        %s846 = sadd.s32 %s844, %s845
        %s847 = smul.addr %s846, 8
        %s848 = scalar_lea.vmem %s7, %s847
      $region60: #{model_tanh_forward.1} parent=55 // pred_fallthru
        _
    $region56: #{model_tanh_forward.1} parent=5 // pred_fallthru
      _
  $region6: #{model_tanh_forward.1} parent=0 // loop_footer
    %s17 = sadd.s32 1, %s13
  $region7: #{model_tanh_forward.1} parent=0 // loop_footer_branch
    %12 = sbr.rel target = $region3
  $region8: #{model_tanh_forward.1} parent=0 // loop_exit
    _

</llo_original>
